<compile_context>
chip_gen: v6e
topology: v6e:2x2x1
jax: 0.10.0
libtpu: 0.0.40
codegen_flags: <defaults>
</compile_context>

<pallas_src>
import jax
import jax.numpy as jnp
from jax.experimental import pallas as pl
from jax.experimental.pallas import tpu as pltpu

GAMMA = 2.0  # TODO(synk): gamma/beta are strength-reduced assuming module defaults (2.0, 4.0).
BETA = 4.0
EPS = 1e-6

_DOUBLE_BUF = 2
_COMPUTE_TEMPS = 8            # f32 tile-sized intermediates of _loss_tile (incl. upcast copies)
_MEGACORE_MIN_ELEMS = 1 << 18  # below this a forced 2-way split isn't worth the step overhead


def _ceil8(x):
    return -(-x // 8) * 8


def _vmem_capacity_bytes():
    try:
        return int(pltpu.get_tpu_info().vmem_capacity_bytes)
    except Exception:
        return 128 << 20  # v5e/v6e default if the query is unavailable


def _step_vmem_bytes(bn, t, C, Cm, l_isz, t_isz, m_isz, masked):
    """Per-grid-step VMEM footprint: double-buffered inputs (sublane-padded) + f32 temps."""
    c_pad = _ceil8(C)
    in_bytes = bn * c_pad * t * (l_isz + t_isz)
    if masked:
        in_bytes += bn * _ceil8(Cm) * t * m_isz
    temps = _COMPUTE_TEMPS * bn * c_pad * t * 4
    return _DOUBLE_BUF * in_bytes + temps


def _plan_tiling(N, C, HW, masked, Cm, l_isz, t_isz, m_isz, budget):
    """Returns (batch_block, hw_tile, hw_padded)."""

    def cost(bn, t):
        return _step_vmem_bytes(bn, t, C, Cm, l_isz, t_isz, m_isz, masked)

    want_split = (N * C * HW) >= _MEGACORE_MIN_ELEMS
    divs_n = [d for d in range(N, 0, -1) if N % d == 0]

    fit_bn = next((d for d in divs_n if cost(d, HW) <= budget), None)
    if fit_bn is not None:
        bn = fit_bn
        if bn == N and want_split:
            if N >= 2:
                # Guarantee >= 2 grid cells so v7x's second TensorCore gets work.
                return next(d for d in divs_n if d < N), HW, HW
            if HW % 128 == 0 and HW >= 256:
                # N == 1: split spatially instead (free -- HW already lane-aligned).
                k = HW // 128
                for d in range(k // 2, 0, -1):
                    if k % d == 0 and cost(1, d * 128) <= budget:
                        return 1, d * 128, HW
            # TODO(synk): N == 1 and HW not 128-aligned: a 2-way split would need a padding
            # pass; keep one grid cell (only v7x's second core idles).
        return bn, HW, HW

    # Too big for full-HW blocks: spatial tiling. Pad HW to a multiple of 128 so every
    # tile is lane-aligned; t = 128 always fits the budget for any sane C.
    hw_pad = -(-HW // 128) * 128
    k = hw_pad // 128
    for d in range(k, 0, -1):
        if k % d == 0 and cost(1, d * 128) <= budget:
            return 1, d * 128, hw_pad
    return 1, 128, hw_pad


def _loss_tile(logit, tgt):
    """Per-element (negated) smooth-focal loss for a (bn, C, T) tile (gamma=2, beta=4)."""
    # Cast AFTER load: inputs travel HBM->VMEM in their native (possibly 16-bit) dtype,
    # all math is f32.
    logit = logit.astype(jnp.float32)
    tgt = tgt.astype(jnp.float32)

    logit = jnp.clip(logit, EPS, 1.0 - EPS)
    # target = target / clamp_min(max over channel dim, eps): one reciprocal per (n, hw)
    # position + a multiply. approx=False: the ~2^-13 error of approx=True could flip the
    # 0.999 is_pos threshold / perturb (1 - tgt)^4, for a win on only 1/C of the elements.
    tmax = jnp.max(tgt, axis=1, keepdims=True)                   # (bn, 1, T)
    inv = pl.reciprocal(jnp.maximum(tmax, EPS), approx=False)
    tgt = tgt * inv

    is_pos = tgt >= 0.999            # == |tgt - 1| <= 1e-3 since tgt <= 1 after normalization
    om_logit = 1.0 - logit
    lg = jnp.log(jnp.where(is_pos, logit, om_logit))             # one log per element
    pos_w = om_logit * om_logit                                  # (1 - logit)^2
    s = 1.0 - tgt
    s2 = s * s
    neg_w = (s2 * s2) * (logit * logit)                          # (1 - tgt)^4 * logit^2
    # NOTE: returns w * log(...) <= 0; the leading negation is folded into the wrapper's
    # final scalar divide.
    return jnp.where(is_pos, pos_w, neg_w) * lg


def _make_nomask_kernel(t_hw, valid_hw, need_pad_mask):
    def kernel(logit_ref, target_ref, lsum_ref):
        val = _loss_tile(logit_ref[...], target_ref[...])
        if need_pad_mask:
            # Exclude wrapper-side HW padding exactly (padded columns would otherwise add
            # a tiny nonzero negative-branch term).
            col = jax.lax.broadcasted_iota(jnp.int32, val.shape, 2) + pl.program_id(1) * t_hw
            val = jnp.where(col < valid_hw, val, 0.0)
        lsum_ref[...] = jnp.broadcast_to(jnp.sum(val), (1, 1, 128))
    return kernel


def _mask_kernel(logit_ref, target_ref, mask_ref, lsum_ref, msum_ref):
    val = _loss_tile(logit_ref[...], target_ref[...])
    m = mask_ref[...].astype(jnp.float32)                        # narrow mask dtype in HBM
    lsum_ref[...] = jnp.broadcast_to(jnp.sum(val * m), (1, 1, 128))
    msum_ref[...] = jnp.broadcast_to(jnp.sum(m), (1, 1, 128))    # native-width mask sum


def smooth_focal_loss(logit, target, mask=None, *, _budget_override=None):
    """logit/target: [N, C, H, W] (any float dtype); mask: [N, C, H, W] or [N, 1, H, W].
    Returns the scalar SmoothFocalLoss (float32)."""
    N, C, H, W = logit.shape
    HW = H * W
    # Keep native dtypes in HBM; the kernel upcasts the loaded tile to f32.
    logit3 = jnp.asarray(logit).reshape(N, C, HW)
    target3 = jnp.asarray(target).reshape(N, C, HW)
    l_isz = logit3.dtype.itemsize
    t_isz = target3.dtype.itemsize

    masked = mask is not None
    if masked:
        m = jnp.asarray(mask)
        if m.dtype == jnp.bool_:
            m = m.astype(jnp.bfloat16)   # 0/1 exact; 1/2 the HBM bytes of an f32 mask
        if (m.ndim != 4 or m.shape[0] != N or m.shape[1] not in (1, C)
                or m.shape[2:] != (H, W)):
            # TODO(synk): exotic broadcastable mask shapes are materialized to full
            # (N,C,H,W); PyTorch's mask.sum() over the original shape would differ.
            m = jnp.broadcast_to(m, (N, C, H, W))
        Cm = m.shape[1]
        mask3 = m.reshape(N, Cm, HW)
        m_isz = mask3.dtype.itemsize
    else:
        Cm, mask3, m_isz = 0, None, 0

    capacity = _vmem_capacity_bytes()
    budget = max(min(int(capacity * 0.7), capacity - (16 << 20)), 8 << 20)
    if _budget_override is not None:
        budget = _budget_override

    bn, t_hw, hw_pad = _plan_tiling(N, C, HW, masked, Cm, l_isz, t_isz, m_isz, budget)

    if hw_pad > HW:
        pad = [(0, 0), (0, 0), (0, hw_pad - HW)]
        logit3 = jnp.pad(logit3, pad)
        target3 = jnp.pad(target3, pad)
        if masked:
            mask3 = jnp.pad(mask3, pad)   # zero pad: exact for both loss*m and mask sums

    num_n = N // bn
    num_t = hw_pad // t_hw
    grid = (num_n, num_t)

    io_spec = pl.BlockSpec((bn, C, t_hw), lambda n, t: (n, 0, t))
    out_spec = pl.BlockSpec((1, 1, 128), lambda n, t: (n * num_t + t, 0, 0))
    part_shape = jax.ShapeDtypeStruct((num_n * num_t, 1, 128), jnp.float32)

    step_cost = _step_vmem_bytes(bn, t_hw, C, Cm, l_isz, t_isz, m_isz, masked)
    vmem_cap = max(32 << 20, min(112 << 20, capacity - (8 << 20)))   # <=56 MiB on 64 MiB v7x
    vmem_limit = int(min(max(step_cost + (2 << 20), 32 << 20), vmem_cap))
    cparams = pltpu.CompilerParams(
        dimension_semantics=("parallel", "parallel"),
        vmem_limit_bytes=vmem_limit,
    )

    if masked:
        mask_spec = pl.BlockSpec((bn, Cm, t_hw), lambda n, t: (n, 0, t))
        lparts, mparts = pl.pallas_call(
            _mask_kernel,
            out_shape=(part_shape, part_shape),
            grid_spec=pltpu.PrefetchScalarGridSpec(
                num_scalar_prefetch=0,
                grid=grid,
                in_specs=[io_spec, io_spec, mask_spec],
                out_specs=(out_spec, out_spec),
            ),
            compiler_params=cparams,
        )(logit3, target3, mask3)
        loss_sum = jnp.sum(lparts[:, 0, 0])
        mask_sum = jnp.sum(mparts[:, 0, 0])
        return -loss_sum / jnp.maximum(mask_sum, EPS)   # sign fold of -loss

    kernel = _make_nomask_kernel(t_hw, HW, hw_pad > HW)
    lparts = pl.pallas_call(
        kernel,
        out_shape=part_shape,
        grid_spec=pltpu.PrefetchScalarGridSpec(
            num_scalar_prefetch=0,
            grid=grid,
            in_specs=[io_spec, io_spec],
            out_specs=out_spec,
        ),
        compiler_params=cparams,
    )(logit3, target3)
    return -jnp.sum(lparts[:, 0, 0]) / float(N * C * HW)   # sign fold of -loss


# TODO(synk): for small C (e.g. C=4) the (bn, C, t) layout leaves vregs half-empty
# (sublane padding to 8); a sublane-dense repack with a strided in-kernel channel-max
# would recover ~2x VPU efficiency but is not implemented here.


def _ref_loss(logit, target, mask=None):
    logit = jnp.clip(logit.astype(jnp.float32), EPS, 1.0 - EPS)
    target = target.astype(jnp.float32)
    tmax = jnp.max(target, axis=1, keepdims=True)
    target = target / jnp.maximum(tmax, EPS)
    loss = -jnp.where(
        jnp.abs(target - 1.0) <= 0.001,
        (1.0 - logit) ** GAMMA * jnp.log(logit),
        (1.0 - target) ** BETA * logit ** GAMMA * jnp.log(1.0 - logit),
    )
    if mask is not None:
        mask = mask.astype(jnp.float32)
        return (loss * mask).sum() / jnp.maximum(mask.sum(), EPS)
    return loss.mean()


if __name__ == "__main__":
    key = jax.random.PRNGKey(0)
    k1, k2, k3, k4 = jax.random.split(key, 4)
    N, C, H, W = 2, 4, 16, 16

    # logits in (0,1) (post-sigmoid heatmap), targets nonnegative heatmaps
    logit = jax.nn.sigmoid(jax.random.normal(k1, (N, C, H, W), jnp.float32))
    target = jnp.clip(jax.random.uniform(k2, (N, C, H, W), jnp.float32), 0.0, 1.0)
    target = target.at[:, :, 3, 5].set(1.0)   # plant exact "positive" peaks

    # 1) no-mask path (mean), f32 inputs
    out = jax.block_until_ready(smooth_focal_loss(logit, target))
    ref = _ref_loss(logit, target)
    assert jnp.allclose(out, ref, rtol=1e-5, atol=1e-6), (out, ref)

    # 2) full-channel float32 mask
    mask_c = (jax.random.uniform(k3, (N, C, H, W)) > 0.3).astype(jnp.float32)
    out = jax.block_until_ready(smooth_focal_loss(logit, target, mask_c))
    ref = _ref_loss(logit, target, mask_c)
    assert jnp.allclose(out, ref, rtol=1e-5, atol=1e-6), (out, ref)

    # 3) per-pixel bool mask (kept narrow on the kernel side)
    mask_1 = jax.random.uniform(k3, (N, 1, H, W)) > 0.3
    out = jax.block_until_ready(smooth_focal_loss(logit, target, mask_1))
    ref = _ref_loss(logit, target, mask_1.astype(jnp.float32))
    assert jnp.allclose(out, ref, rtol=1e-5, atol=1e-6), (out, ref)

    # 4) bf16 inputs: kernel reads bf16, computes in f32 (ref on the same rounded values)
    logit_bf = logit.astype(jnp.bfloat16)
    target_bf = target.astype(jnp.bfloat16)
    out = jax.block_until_ready(smooth_focal_loss(logit_bf, target_bf))
    ref = _ref_loss(logit_bf.astype(jnp.float32), target_bf.astype(jnp.float32))
    assert jnp.allclose(out, ref, rtol=1e-5, atol=1e-6), (out, ref)

    # 5) forced spatial tiling + HW padding (HW=320 not a multiple of 128)
    Hp, Wp = 16, 20
    logit_p = jax.nn.sigmoid(jax.random.normal(k4, (N, C, Hp, Wp), jnp.float32))
    target_p = jnp.clip(jax.random.uniform(k2, (N, C, Hp, Wp), jnp.float32), 0.0, 1.0)
    target_p = target_p.at[:, :, 2, 7].set(1.0)
    out = jax.block_until_ready(smooth_focal_loss(logit_p, target_p, _budget_override=60_000))
    ref = _ref_loss(logit_p, target_p)
    assert jnp.allclose(out, ref, rtol=1e-5, atol=1e-6), (out, ref)

    mask_p = (jax.random.uniform(k3, (N, C, Hp, Wp)) > 0.3).astype(jnp.float32)
    out = jax.block_until_ready(
        smooth_focal_loss(logit_p, target_p, mask_p, _budget_override=60_000))
    ref = _ref_loss(logit_p, target_p, mask_p)
    assert jnp.allclose(out, ref, rtol=1e-5, atol=1e-6), (out, ref)

    print("KERNEL_OK")
</pallas_src>

<mosaic_0001>
module attributes {stable_mosaic.version = 11 : i64} {
  func.func @kernel(%arg0: i32, %arg1: i32, %arg2: memref<2x4x256xf32, #tpu.memory_space<vmem>>, %arg3: memref<2x4x256xf32, #tpu.memory_space<vmem>>, %arg4: memref<1x1x128xf32, #tpu.memory_space<vmem>>) attributes {dimension_semantics = [#tpu.dimension_semantics<parallel>, #tpu.dimension_semantics<parallel>], iteration_bounds = array<i64: 1, 1>, scalar_prefetch = 0 : i64, scratch_operands = 0 : i64, tpu.core_type = #tpu.core_type<tc>, window_params = [{transform_indices = @transform_0, window_bounds = array<i64: 2, 4, 256>}, {transform_indices = @transform_1, window_bounds = array<i64: 2, 4, 256>}, {transform_indices = @transform_2, window_bounds = array<i64: 1, 1, 128>}]} {
    %c0 = arith.constant 0 : index
    %c0_0 = arith.constant 0 : index
    %c0_1 = arith.constant 0 : index
    %0 = vector.load %arg2[%c0, %c0_0, %c0_1] : memref<2x4x256xf32, #tpu.memory_space<vmem>>, vector<2x4x256xf32>
    %c0_2 = arith.constant 0 : index
    %c0_3 = arith.constant 0 : index
    %c0_4 = arith.constant 0 : index
    %1 = vector.load %arg3[%c0_2, %c0_3, %c0_4] : memref<2x4x256xf32, #tpu.memory_space<vmem>>, vector<2x4x256xf32>
    %cst = arith.constant 9.99999997E-7 : f32
    %cst_5 = arith.constant 0.999998986 : f32
    %2 = vector.broadcast %cst : f32 to vector<2x4x256xf32>
    %3 = arith.maximumf %2, %0 : vector<2x4x256xf32>
    %4 = vector.broadcast %cst_5 : f32 to vector<2x4x256xf32>
    %5 = arith.minimumf %4, %3 : vector<2x4x256xf32>
    %cst_6 = arith.constant dense<0xFF800000> : vector<2x256xf32>
    %6 = vector.multi_reduction <maximumf>, %1, %cst_6 [1] : vector<2x4x256xf32> to vector<2x256xf32>
    %7 = vector.shape_cast %6 : vector<2x256xf32> to vector<2x1x256xf32>
    %cst_7 = arith.constant 9.99999997E-7 : f32
    %8 = vector.broadcast %cst_7 : f32 to vector<2x1x256xf32>
    %9 = arith.maximumf %7, %8 : vector<2x1x256xf32>
    %10 = tpu.reciprocal %9 : vector<2x1x256xf32> -> vector<2x1x256xf32>
    %11 = vector.broadcast %10 : vector<2x1x256xf32> to vector<2x4x256xf32>
    %12 = arith.mulf %1, %11 : vector<2x4x256xf32>
    %cst_8 = arith.constant 9.990000e-01 : f32
    %13 = vector.broadcast %cst_8 : f32 to vector<2x4x256xf32>
    %14 = arith.cmpf oge, %12, %13 : vector<2x4x256xf32>
    %cst_9 = arith.constant 1.000000e+00 : f32
    %15 = vector.broadcast %cst_9 : f32 to vector<2x4x256xf32>
    %16 = arith.subf %15, %5 : vector<2x4x256xf32>
    %17 = arith.select %14, %5, %16 : vector<2x4x256xi1>, vector<2x4x256xf32>
    %18 = math.log %17 : vector<2x4x256xf32>
    %19 = arith.mulf %16, %16 : vector<2x4x256xf32>
    %cst_10 = arith.constant 1.000000e+00 : f32
    %20 = vector.broadcast %cst_10 : f32 to vector<2x4x256xf32>
    %21 = arith.subf %20, %12 : vector<2x4x256xf32>
    %22 = arith.mulf %21, %21 : vector<2x4x256xf32>
    %23 = arith.mulf %22, %22 : vector<2x4x256xf32>
    %24 = arith.mulf %5, %5 : vector<2x4x256xf32>
    %25 = arith.mulf %23, %24 : vector<2x4x256xf32>
    %26 = arith.select %14, %19, %25 : vector<2x4x256xi1>, vector<2x4x256xf32>
    %27 = arith.mulf %26, %18 : vector<2x4x256xf32>
    %28 = vector.shape_cast %27 : vector<2x4x256xf32> to vector<1x2x4x256xf32>
    %cst_11 = arith.constant dense<0.000000e+00> : vector<1xf32>
    %29 = vector.multi_reduction <add>, %28, %cst_11 [1, 2, 3] : vector<1x2x4x256xf32> to vector<1xf32>
    %30 = vector.shape_cast %29 : vector<1xf32> to vector<1x1x1x1xf32>
    %31 = vector.extract %30[0, 0, 0, 0] : f32 from vector<1x1x1x1xf32>
    %32 = vector.broadcast %31 : f32 to vector<1x1x128xf32>
    %c0_12 = arith.constant 0 : index
    %c0_13 = arith.constant 0 : index
    %c0_14 = arith.constant 0 : index
    %33 = vector.load %arg4[%c0_12, %c0_13, %c0_14] : memref<1x1x128xf32, #tpu.memory_space<vmem>>, vector<1x1x128xf32>
    tpu.vector_store %arg4[%c0_12, %c0_13, %c0_14], %32 {strides = array<i32>} : memref<1x1x128xf32, #tpu.memory_space<vmem>>, vector<1x1x128xf32>,
    return
  }
  func.func @transform_0(%arg0: i32, %arg1: i32) -> (i32, i32, i32) {
    %c0_i32 = arith.constant 0 : i32
    %c0_i32_0 = arith.constant 0 : i32
    return %arg0, %c0_i32, %arg1 : i32, i32, i32
  }
  func.func @transform_1(%arg0: i32, %arg1: i32) -> (i32, i32, i32) {
    %c0_i32 = arith.constant 0 : i32
    %c0_i32_0 = arith.constant 0 : i32
    return %arg0, %c0_i32, %arg1 : i32, i32, i32
  }
  func.func @transform_2(%arg0: i32, %arg1: i32) -> (i32, i32, i32) {
    %c1_i32 = arith.constant 1 : i32
    %0 = arith.muli %arg0, %c1_i32 : i32
    %1 = arith.addi %0, %arg1 : i32
    %c0_i32 = arith.constant 0 : i32
    %c0_i32_0 = arith.constant 0 : i32
    %c0_i32_1 = arith.constant 0 : i32
    return %1, %c0_i32, %c0_i32_0 : i32, i32, i32
  }
}

</mosaic_0001>

<llo_original>
// kernel: tpu_custom_call.1
$region0: #{tpu_custom_call.1}
  #allocation0 [shape = 'u32[]', space=smem, size = 0x4, offset = 0x4, fixed_abs, tag = 'smem constant byte address 0x4 - core index']
  #allocation1 [shape = 'u32[144,128]{1,0:T(1,128)}', space=vmem, size = 0x12000, scoped, tag = 'internal scratch']
  %s0 = inlined_call_operand.hbm [shape: f32[2,4,256], index: 0, kind: input, shape index: {}]
  %s1 = inlined_call_operand.hbm [shape: f32[2,4,256], index: 1, kind: input, shape index: {}]
  %s2 = inlined_call_operand.hbm [shape: f32[1,1,128], index: 2, kind: output, shape index: {}]
  %s3 = sld [smem:[#allocation0]]
  $region26: #{tpu_custom_call.1} parent=0
    _
  %s5 = ssub.s32 1, %s3
  %s6 = scalar_select 0, %s5, %s3
  $region1: #{tpu_custom_call.1} parent=0
    #allocation2 [shape = 'u8[8192]{0}', space=vmem, size = 0x2000, scoped, tag = 'input window, operand 0, single buffered']
    #allocation3 [shape = 's32[1]{0}', space=sflag, size = 0x4, scoped, tag = 'scoped memory for tpu_custom_call.1']
    #allocation4 [shape = 's32[1]{0}', space=sflag, size = 0x4, scoped, tag = 'scoped memory for tpu_custom_call.1']
    #allocation5 [shape = 'u8[8192]{0}', space=vmem, size = 0x2000, scoped, tag = 'input window, operand 1, single buffered']
    #allocation6 [shape = 's32[1]{0}', space=sflag, size = 0x4, scoped, tag = 'scoped memory for tpu_custom_call.1']
    #allocation7 [shape = 'u8[512]{0}', space=vmem, size = 0x400, scoped, tag = 'output window, operand 0, single buffered']
    %7 = vsyncpa [#allocation3], 0
    %8 = vsyncpa [#allocation6], 0
    %9 = vsyncpa [#allocation4], 0
    // Predicated region
    $region2: #{tpu_custom_call.1} parent=1 // pred_check
      _
    $region3: #{tpu_custom_call.1} parent=1 // pred_check_branch
      %11 = sbr.rel (0) target = $region5
    $region4: #{tpu_custom_call.1} parent=1 // pred_region
      %s13 = ssub.s32 256, 256
      %14 = vsyncadd [#allocation3], %s13
      %s15 = sshll.u32 [#allocation2], 4
      %s16 = int_to_ptr.vmem [resolvable:$true] %s15
      %21 = dma.hbm_to_vmem [thread:$0]  %s0, 256, %s16, [#allocation3], 128, 128, 8
    $region5: #{tpu_custom_call.1} parent=1 // pred_fallthru
      _
    // Predicated region
    $region6: #{tpu_custom_call.1} parent=1 // pred_check
      _
    $region7: #{tpu_custom_call.1} parent=1 // pred_check_branch
      %23 = sbr.rel (0) target = $region9
    $region8: #{tpu_custom_call.1} parent=1 // pred_region
      %s25 = ssub.s32 256, 256
      %26 = vsyncadd [#allocation6], %s25
      %s27 = sshll.u32 [#allocation5], 4
      %s28 = int_to_ptr.vmem [resolvable:$true] %s27
      %33 = dma.hbm_to_vmem [thread:$0]  %s1, 256, %s28, [#allocation6], 128, 128, 8
    $region9: #{tpu_custom_call.1} parent=1 // pred_fallthru
      _
    // Predicated region
    $region10: #{tpu_custom_call.1} parent=1 // pred_check
      _
    $region11: #{tpu_custom_call.1} parent=1 // pred_check_branch
      %35 = sbr.rel (0) target = $region13
    $region12: #{tpu_custom_call.1} parent=1 // pred_region
      %36 = dma.done [#allocation3], 256
    $region13: #{tpu_custom_call.1} parent=1 // pred_fallthru
      _
    // Predicated region
    $region14: #{tpu_custom_call.1} parent=1 // pred_check
      _
    $region15: #{tpu_custom_call.1} parent=1 // pred_check_branch
      %38 = sbr.rel (0) target = $region17
    $region16: #{tpu_custom_call.1} parent=1 // pred_region
      %39 = dma.done [#allocation6], 256
    $region17: #{tpu_custom_call.1} parent=1 // pred_fallthru
      _
    %s40 = sadd.s32 0, 0
    %v41 = vld [vmem:[#allocation2] sm:$0xff]
    %v42 = vld [vmem:[#allocation2 + $0x8] sm:$0xff]
    %v43 = vld [vmem:[#allocation5] sm:$0xff]
    %v44 = vld [vmem:[#allocation5 + $0x8] sm:$0xff]
    %v45 = vmax.f32 %v41, 1e-06
    %v46 = vmax.f32 %v42, 1e-06
    %v47 = vmin.f32 %v45, 0.999999
    %v48 = vmin.f32 %v46, 0.999999
    %v51 = vcombine.high %v43, %v43
    %v52 = vcombine.high %v44, %v44
    %vm55 = vcmask 1043456
    %v56 = vsel %vm55, %v43, -inf
    %v57 = vrot.slane %v56, 4
    %v58 = vmax.f32 %v56, %v57
    %v59 = vrot.slane %v58, 2
    %v60 = vmax.f32 %v58, %v59
    %v61 = vrot.slane %v60, 1
    %v62 = vmax.f32 %v60, %v61
    %v63 = vsel %vm55, %v51, -inf
    %v64 = vrot.slane %v63, 4
    %v65 = vmax.f32 %v63, %v64
    %v66 = vrot.slane %v65, 2
    %v67 = vmax.f32 %v65, %v66
    %v68 = vrot.slane %v67, 1
    %v69 = vmax.f32 %v67, %v68
    %v70 = vsel %vm55, %v44, -inf
    %v71 = vrot.slane %v70, 4
    %v72 = vmax.f32 %v70, %v71
    %v73 = vrot.slane %v72, 2
    %v74 = vmax.f32 %v72, %v73
    %v75 = vrot.slane %v74, 1
    %v76 = vmax.f32 %v74, %v75
    %v77 = vsel %vm55, %v52, -inf
    %v78 = vrot.slane %v77, 4
    %v79 = vmax.f32 %v77, %v78
    %v80 = vrot.slane %v79, 2
    %v81 = vmax.f32 %v79, %v80
    %v82 = vrot.slane %v81, 1
    %v83 = vmax.f32 %v81, %v82
    %v84 = vmax.f32 %v62, 1e-06
    %v85 = vmax.f32 %v69, 1e-06
    %v86 = vmax.f32 %v76, 1e-06
    %v87 = vmax.f32 %v83, 1e-06
    %v88 = vrcp.pop %v84
    %v89 = vrcp.pop %v85
    %v90 = vrcp.pop %v86
    %v91 = vrcp.pop %v87
    %v96 = vcombine.low %v88, %v89
    %v97 = vcombine.low %v90, %v91
    %v100 = vmul.f32 %v43, %v96
    %v101 = vmul.f32 %v44, %v97
    %vm102 = vcmp.ge.f32.partialorder %v100, 0.999
    %vm103 = vcmp.ge.f32.partialorder %v101, 0.999
    %v104 = vsub.f32 1.0, %v47
    %v105 = vsub.f32 1.0, %v48
    %v106 = vsel %vm102, %v47, %v104
    %v107 = vsel %vm103, %v48, %v105
    %v108 = vlog2.pop %v106
    %v109 = vmul.f32 %v108, 0.6931472
    %v110 = vlog2.pop %v107
    %v111 = vmul.f32 %v110, 0.6931472
    %v112 = vmul.f32 %v104, %v104
    %v113 = vmul.f32 %v105, %v105
    %v114 = vsub.f32 1.0, %v100
    %v115 = vsub.f32 1.0, %v101
    %v116 = vmul.f32 %v114, %v114
    %v117 = vmul.f32 %v115, %v115
    %v118 = vmul.f32 %v116, %v116
    %v119 = vmul.f32 %v117, %v117
    %v120 = vmul.f32 %v47, %v47
    %v121 = vmul.f32 %v48, %v48
    %v122 = vmul.f32 %v118, %v120
    %v123 = vmul.f32 %v119, %v121
    %v124 = vsel %vm102, %v112, %v122
    %v125 = vsel %vm103, %v113, %v123
    %v126 = vmul.f32 %v124, %v109
    %v127 = vmul.f32 %v125, %v111
    %v130 = vcombine.high %v126, %v126
    %v131 = vcombine.high %v127, %v127
    %v134 = vsel %vm55, %v126, 0.0
    %v135 = vsel %vm55, %v130, 0.0
    %v136 = vadd.f32 %v134, %v135
    %v137 = vsel %vm55, %v127, 0.0
    %v138 = vadd.f32 %v136, %v137
    %v139 = vsel %vm55, %v131, 0.0
    %v140 = vadd.f32 %v138, %v139
    %141 = vadd.xlane.f32.xlu0 %v140
    %v142 = vpop.xlane.xlu0 %141
    %v143 = vrot.slane %v142, 4
    %v144 = vadd.f32 %v142, %v143
    %v145 = vrot.slane %v144, 2
    %v146 = vadd.f32 %v144, %v145
    %v147 = vrot.slane %v146, 1
    %v148 = vadd.f32 %v146, %v147
    %s149 = vtos %v148
    %v150 = vstv %s149
    %151 = vst [vmem:[#allocation7] sm:$0x1] %v150
    // Predicated region
    $region18: #{tpu_custom_call.1} parent=1 // pred_check
      _
    $region19: #{tpu_custom_call.1} parent=1 // pred_check_branch
      %153 = sbr.rel (0) target = $region21
    $region20: #{tpu_custom_call.1} parent=1 // pred_region
      %s154 = sadd.s32 0, 0
      %s156 = ssub.s32 16, 16
      %157 = vsyncadd [#allocation4], %s156
      %s158 = smul.addr %s154, 16
      %s159 = scalar_lea.hbm %s2, %s158
      %s161 = sshll.u32 [#allocation7], 4
      %s162 = int_to_ptr.vmem [resolvable:$true] %s161
      %164 = dma.vmem_to_hbm [thread:$0]  %s162, 16, %s159, [#allocation4]
    $region21: #{tpu_custom_call.1} parent=1 // pred_fallthru
      _
    // Predicated region
    $region22: #{tpu_custom_call.1} parent=1 // pred_check
      _
    $region23: #{tpu_custom_call.1} parent=1 // pred_check_branch
      %166 = sbr.rel (0) target = $region25
    $region24: #{tpu_custom_call.1} parent=1 // pred_region
      %167 = dma.done [#allocation4], 16
    $region25: #{tpu_custom_call.1} parent=1 // pred_fallthru
      _
    %168 = vsyncpa [#allocation3], 1
    %169 = vsyncpa [#allocation6], 1
    %170 = vsyncpa [#allocation4], 1

</llo_original>
